<compile_context>
chip_gen: v7x
topology: tpu7x:2x2x1
jax: 0.10.0
libtpu: 0.0.40
codegen_flags: <defaults>
</compile_context>

<pallas_src>
import functools
import math

import jax
import jax.numpy as jnp
from jax.experimental import pallas as pl
from jax.experimental.pallas import tpu as pltpu

_LANE = 128
_HAS_BUFFERED = hasattr(pl, "Buffered")


def _round_up(x: int, m: int) -> int:
    return (x + m - 1) // m * m


def _mlp_fused_kernel(n_layers: int, mxu_dtype, x_ref, *refs):
    """refs = (w0, b0, w1, b1, ..., w_{n-1}, b_{n-1}, o_ref).

    Computes x @ W0 + b0 -> tanh -> ... -> @ W_{n-1} + b_{n-1}.  All
    intermediates stay in vregs/VMEM; matmuls run bf16 x bf16 on the MXU with
    f32 accumulation; bias-add / tanh are done in f32.
    """
    o_ref = refs[-1]
    h = x_ref[...].astype(jnp.float32)
    for i in range(n_layers):
        w = refs[2 * i][...]                                   # bf16 (in_p, out_p)
        b = refs[2 * i + 1][...].astype(jnp.float32)           # (1, out_p) row
        h = jnp.dot(h.astype(mxu_dtype), w,
                    preferred_element_type=jnp.float32) + b
        if i < n_layers - 1:                                   # Tanh between hidden layers only
            h = jnp.tanh(h)                                    # EUP slot, ~free next to MXU
    o_ref[...] = h.astype(o_ref.dtype)


def prepare_mlp_params(params, *, lane: int = _LANE, mxu_dtype=jnp.bfloat16):
    """Pad + cast weights ONCE (hoisted out of the per-forward hot path).

    params: list of (w_t, b) with w_t shaped (in, out) == torch weight.T.
    Returns (flat_wb, pdims, dims): lane-padded bf16 weights, f32 (1, out) biases.
    """
    dims = [params[0][0].shape[0]] + [w.shape[1] for (w, _) in params]
    pdims = [_round_up(d, lane) for d in dims]
    flat_wb = []
    for i, (w, b) in enumerate(params):
        wp = jnp.zeros((pdims[i], pdims[i + 1]), mxu_dtype)
        wp = wp.at[: w.shape[0], : w.shape[1]].set(w.astype(mxu_dtype))
        bpad = jnp.zeros((1, pdims[i + 1]), jnp.float32)
        bpad = bpad.at[0, : b.shape[0]].set(b.astype(jnp.float32))
        flat_wb += [wp, bpad]
    return tuple(flat_wb), tuple(pdims), tuple(dims)


def mlp_forward_fused(prepared, x, *, max_bm: int = 128, mxu_dtype=jnp.bfloat16):
    """Fused MLP forward. `prepared` comes from prepare_mlp_params; x: (B, in)."""
    flat_wb, pdims, dims = prepared
    n_layers = len(flat_wb) // 2
    B, in_f = x.shape
    assert in_f == dims[0], (in_f, dims[0])
    out_f = dims[-1]

    # Batch tiling: sublane-aligned, and split into >=2 tiles when possible so
    # the "parallel" grid axis shards across v7x's two TensorCores.
    sub = 8 if jnp.dtype(x.dtype).itemsize >= 4 else 16
    bp = _round_up(B, sub)
    if sub < bp <= max_bm:
        bm = _round_up(pl.cdiv(bp, 2), sub)
    else:
        bm = min(bp, max_bm)
    bp = _round_up(bp, bm)

    # Skip the pad copy entirely when the input is already aligned.
    if bp == B and pdims[0] == in_f:
        xp = x
    else:
        xp = jnp.zeros((bp, pdims[0]), x.dtype).at[:B, :in_f].set(x)

    grid = (bp // bm,)

    # Weights/biases: constant block index -> DMA'd once, resident in VMEM
    # across batch tiles; single-buffered so they cost 1x (not 2x) their size.
    wb_kwargs = {"pipeline_mode": pl.Buffered(1)} if _HAS_BUFFERED else {}
    in_specs = [pl.BlockSpec((bm, pdims[0]), lambda i: (i, 0))]
    for li in range(n_layers):
        in_specs.append(
            pl.BlockSpec((pdims[li], pdims[li + 1]), lambda i: (0, 0), **wb_kwargs))
        in_specs.append(
            pl.BlockSpec((1, pdims[li + 1]), lambda i: (0, 0), **wb_kwargs))
    out_specs = pl.BlockSpec((bm, pdims[-1]), lambda i: (i, 0))

    # VMEM budget: resident weights + double-buffered in/out tiles + f32
    # intermediate slack.  Capped at 64 MiB so the limit is valid on v7x.
    isz = lambda a: jnp.dtype(a.dtype).itemsize
    w_bytes = sum(int(a.size) * isz(a) for a in flat_wb)
    io_bytes = 2 * bm * (pdims[0] + pdims[-1]) * isz(x) * 2
    live_bytes = 2 * bm * max(pdims) * 4
    need = (1 if _HAS_BUFFERED else 2) * w_bytes + io_bytes + live_bytes + (4 << 20)
    vmem_limit = int(min(max(need, 32 << 20), 64 << 20))
    # TODO(synk): if sum(padded weights) exceeds the per-TC VMEM budget (esp.
    # v7x 64 MiB), switch to layer-streamed weights (memory_space=pl.ANY +
    # double-buffered pltpu.make_async_copy) or a K/N-tiled grid with a
    # scratch f32 accumulator and pl.when init/finalize.

    flops = 2 * bp * sum(pdims[i] * pdims[i + 1] for i in range(n_layers))
    transcendentals = bp * sum(pdims[1:-1])
    bytes_accessed = int(xp.size) * isz(xp) + w_bytes + bp * pdims[-1] * isz(x)

    out_p = pl.pallas_call(
        functools.partial(_mlp_fused_kernel, n_layers, mxu_dtype),
        out_shape=jax.ShapeDtypeStruct((bp, pdims[-1]), x.dtype),
        grid=grid,
        in_specs=in_specs,
        out_specs=out_specs,
        compiler_params=pltpu.CompilerParams(
            dimension_semantics=("parallel",),
            vmem_limit_bytes=vmem_limit),
        cost_estimate=pl.CostEstimate(
            flops=flops,
            transcendentals=transcendentals,
            bytes_accessed=bytes_accessed),
    )(xp, *flat_wb)

    if out_p.shape == (B, out_f):
        return out_p
    return out_p[:B, :out_f]


def init_mlp_params(key, sizes, dtype=jnp.float32):
    """Deterministic init mimicking torch.nn.Linear defaults (U(+-1/sqrt(fan_in)))."""
    params = []
    for i in range(len(sizes) - 1):
        fan_in, fan_out = sizes[i], sizes[i + 1]
        key, kw, kb = jax.random.split(key, 3)
        bound = 1.0 / math.sqrt(fan_in)
        w_t = jax.random.uniform(kw, (fan_in, fan_out), dtype, -bound, bound)  # (in, out) == torch weight.T
        b = jax.random.uniform(kb, (fan_out,), dtype, -bound, bound)
        params.append((w_t, b))
    return params


def mlp_forward_ref(params, x, mxu_dtype=None):
    """Pure-JAX reference.  mxu_dtype=bf16 mirrors the kernel's matmul dtype."""
    n = len(params)
    h = x.astype(jnp.float32)
    for i, (w_t, b) in enumerate(params):
        if mxu_dtype is not None:
            h = jnp.dot(h.astype(mxu_dtype), w_t.astype(mxu_dtype),
                        preferred_element_type=jnp.float32) + b.astype(jnp.float32)
        else:
            h = h @ w_t + b
        if i < n - 1:
            h = jnp.tanh(h)
    return h.astype(x.dtype)


if __name__ == "__main__":
    # MLP(sizes=(32, 64, 16)): Linear(32,64) -> Tanh -> Linear(64,16)
    sizes = (32, 64, 16)
    batch = 8

    key = jax.random.PRNGKey(0)
    key, kx = jax.random.split(key)
    x = jax.random.normal(kx, (batch, sizes[0]), jnp.float32)
    params = init_mlp_params(key, sizes)

    prepared = prepare_mlp_params(params)          # pad + bf16-cast once
    out = mlp_forward_fused(prepared, x)
    out = jax.block_until_ready(out)
    assert out.shape == (batch, sizes[-1])

    # Matched-precision reference (bf16 matmul, f32 accumulation) -> tight check.
    ref_bf16 = mlp_forward_ref(params, x, mxu_dtype=jnp.bfloat16)
    assert jnp.allclose(out, ref_bf16, atol=1e-3, rtol=1e-3)

    # Full-f32 reference -> loose sanity check (bf16 MXU inputs lose ~3 digits).
    ref_f32 = mlp_forward_ref(params, x)
    assert jnp.allclose(out, ref_f32, atol=5e-2, rtol=5e-2)

    print("KERNEL_OK")
</pallas_src>

<mosaic_0001>
module attributes {stable_mosaic.version = 11 : i64} {
  func.func @_mlp_fused_kernel(%arg0: i32, %arg1: memref<8x128xf32, #tpu.memory_space<vmem>>, %arg2: memref<128x128xbf16, #tpu.memory_space<vmem>>, %arg3: memref<1x128xf32, #tpu.memory_space<vmem>>, %arg4: memref<128x128xbf16, #tpu.memory_space<vmem>>, %arg5: memref<1x128xf32, #tpu.memory_space<vmem>>, %arg6: memref<8x128xf32, #tpu.memory_space<vmem>>) attributes {dimension_semantics = [#tpu.dimension_semantics<parallel>], iteration_bounds = array<i64: 1>, scalar_prefetch = 0 : i64, scratch_operands = 0 : i64, tpu.core_type = #tpu.core_type<tc>, window_params = [{transform_indices = @transform_0, window_bounds = array<i64: 8, 128>}, {pipeline_mode = #tpu.pipeline_mode<synchronous>, transform_indices = @transform_1, window_bounds = array<i64: 128, 128>}, {pipeline_mode = #tpu.pipeline_mode<synchronous>, transform_indices = @transform_2, window_bounds = array<i64: 1, 128>}, {pipeline_mode = #tpu.pipeline_mode<synchronous>, transform_indices = @transform_3, window_bounds = array<i64: 128, 128>}, {pipeline_mode = #tpu.pipeline_mode<synchronous>, transform_indices = @transform_4, window_bounds = array<i64: 1, 128>}, {transform_indices = @transform_5, window_bounds = array<i64: 8, 128>}]} {
    %c0 = arith.constant 0 : index
    %c0_0 = arith.constant 0 : index
    %0 = vector.load %arg1[%c0, %c0_0] : memref<8x128xf32, #tpu.memory_space<vmem>>, vector<8x128xf32>
    %c0_1 = arith.constant 0 : index
    %c0_2 = arith.constant 0 : index
    %1 = vector.load %arg2[%c0_1, %c0_2] : memref<128x128xbf16, #tpu.memory_space<vmem>>, vector<128x128xbf16>
    %c0_3 = arith.constant 0 : index
    %c0_4 = arith.constant 0 : index
    %2 = vector.load %arg3[%c0_3, %c0_4] : memref<1x128xf32, #tpu.memory_space<vmem>>, vector<1x128xf32>
    %3 = arith.truncf %0 : vector<8x128xf32> to vector<8x128xbf16>
    %cst = arith.constant dense<0.000000e+00> : vector<8x128xf32>
    %4 = tpu.matmul %3, %1, %cst {dimension_numbers = #tpu.dot_dimension_numbers<[1], [0], [0], [1], [0, 0, 1, 1], [], []>} : vector<8x128xbf16>, vector<128x128xbf16>, vector<8x128xf32> -> vector<8x128xf32>
    %5 = vector.broadcast %2 : vector<1x128xf32> to vector<8x128xf32>
    %6 = arith.addf %4, %5 : vector<8x128xf32>
    %7 = math.tanh %6 : vector<8x128xf32>
    %c0_5 = arith.constant 0 : index
    %c0_6 = arith.constant 0 : index
    %8 = vector.load %arg4[%c0_5, %c0_6] : memref<128x128xbf16, #tpu.memory_space<vmem>>, vector<128x128xbf16>
    %c0_7 = arith.constant 0 : index
    %c0_8 = arith.constant 0 : index
    %9 = vector.load %arg5[%c0_7, %c0_8] : memref<1x128xf32, #tpu.memory_space<vmem>>, vector<1x128xf32>
    %10 = arith.truncf %7 : vector<8x128xf32> to vector<8x128xbf16>
    %cst_9 = arith.constant dense<0.000000e+00> : vector<8x128xf32>
    %11 = tpu.matmul %10, %8, %cst_9 {dimension_numbers = #tpu.dot_dimension_numbers<[1], [0], [0], [1], [0, 0, 1, 1], [], []>} : vector<8x128xbf16>, vector<128x128xbf16>, vector<8x128xf32> -> vector<8x128xf32>
    %12 = vector.broadcast %9 : vector<1x128xf32> to vector<8x128xf32>
    %13 = arith.addf %11, %12 : vector<8x128xf32>
    %c0_10 = arith.constant 0 : index
    %c0_11 = arith.constant 0 : index
    %14 = vector.load %arg6[%c0_10, %c0_11] : memref<8x128xf32, #tpu.memory_space<vmem>>, vector<8x128xf32>
    tpu.vector_store %arg6[%c0_10, %c0_11], %13 {strides = array<i32>} : memref<8x128xf32, #tpu.memory_space<vmem>>, vector<8x128xf32>,
    return
  }
  func.func @transform_0(%arg0: i32) -> (i32, i32) {
    %c0_i32 = arith.constant 0 : i32
    %c0_i32_0 = arith.constant 0 : i32
    return %arg0, %c0_i32 : i32, i32
  }
  func.func @transform_1(%arg0: i32) -> (i32, i32) {
    %c0_i32 = arith.constant 0 : i32
    %c0_i32_0 = arith.constant 0 : i32
    %c0_i32_1 = arith.constant 0 : i32
    return %c0_i32, %c0_i32_0 : i32, i32
  }
  func.func @transform_2(%arg0: i32) -> (i32, i32) {
    %c0_i32 = arith.constant 0 : i32
    %c0_i32_0 = arith.constant 0 : i32
    %c0_i32_1 = arith.constant 0 : i32
    return %c0_i32, %c0_i32_0 : i32, i32
  }
  func.func @transform_3(%arg0: i32) -> (i32, i32) {
    %c0_i32 = arith.constant 0 : i32
    %c0_i32_0 = arith.constant 0 : i32
    %c0_i32_1 = arith.constant 0 : i32
    return %c0_i32, %c0_i32_0 : i32, i32
  }
  func.func @transform_4(%arg0: i32) -> (i32, i32) {
    %c0_i32 = arith.constant 0 : i32
    %c0_i32_0 = arith.constant 0 : i32
    %c0_i32_1 = arith.constant 0 : i32
    return %c0_i32, %c0_i32_0 : i32, i32
  }
  func.func @transform_5(%arg0: i32) -> (i32, i32) {
    %c0_i32 = arith.constant 0 : i32
    %c0_i32_0 = arith.constant 0 : i32
    return %arg0, %c0_i32 : i32, i32
  }
}

</mosaic_0001>

<llo_original>
// kernel: tpu_custom_call.1
$region0: #{tpu_custom_call.1}
  #allocation0 [shape = 'u32[]', space=smem, size = 0x4, offset = 0x4, fixed_abs, tag = 'smem constant byte address 0x4 - core index']
  #allocation1 [shape = 'u32[144,128]{1,0:T(1,128)}', space=vmem, size = 0x12000, scoped, tag = 'internal scratch']
  %s0 = inlined_call_operand.hbm [shape: f32[8,128], index: 0, kind: input, shape index: {}]
  %s1 = inlined_call_operand.hbm [shape: bf16[128,128], index: 1, kind: input, shape index: {}]
  %s2 = inlined_call_operand.vmem [shape: f32[1,128], index: 2, kind: input, shape index: {}]
  %s3 = inlined_call_operand.hbm [shape: bf16[128,128], index: 3, kind: input, shape index: {}]
  %s4 = inlined_call_operand.vmem [shape: f32[1,128], index: 4, kind: input, shape index: {}]
  %s5 = inlined_call_operand.hbm [shape: f32[8,128], index: 5, kind: output, shape index: {}]
  %s6 = sld [smem:[#allocation0]]
  $region42: #{tpu_custom_call.1} parent=0
    _
  %s8 = ssub.s32 1, %s6
  %s9 = scalar_select 0, %s8, %s6
  $region1: #{tpu_custom_call.1} parent=0
    #allocation2 [shape = 'u8[4096]{0}', space=vmem, size = 0x1000, scoped, tag = 'input window, operand 0, single buffered']
    #allocation3 [shape = 's32[1]{0}', space=sflag, size = 0x4, scoped, tag = 'scoped memory for tpu_custom_call.1']
    #allocation4 [shape = 's32[1]{0}', space=sflag, size = 0x4, scoped, tag = 'scoped memory for tpu_custom_call.1']
    #allocation5 [shape = 'u8[32768]{0}', space=vmem, size = 0x8000, scoped, tag = 'input window, operand 1, single buffered']
    #allocation6 [shape = 's32[1]{0}', space=sflag, size = 0x4, scoped, tag = 'scoped memory for tpu_custom_call.1']
    #allocation7 [shape = 'u8[32768]{0}', space=vmem, size = 0x8000, scoped, tag = 'input window, operand 3, single buffered']
    #allocation8 [shape = 'u8[4096]{0}', space=vmem, size = 0x1000, scoped, tag = 'output window, operand 0, single buffered']
    %10 = vsyncpa [#allocation3], 0
    %11 = vsyncpa [#allocation6], 0
    %12 = vsyncpa [#allocation4], 0
    // Predicated region
    $region2: #{tpu_custom_call.1} parent=1 // pred_check
      _
    $region3: #{tpu_custom_call.1} parent=1 // pred_check_branch
      %14 = sbr.rel (0) target = $region5
    $region4: #{tpu_custom_call.1} parent=1 // pred_region
      %s16 = ssub.s32 128, 128
      %17 = vsyncadd [#allocation3], %s16
      %s19 = sshll.u32 [#allocation2], 4
      %s20 = int_to_ptr.vmem [resolvable:$true] %s19
      %22 = dma.hbm_to_vmem [thread:$0]  %s0, 128, %s20, [#allocation3]
    $region5: #{tpu_custom_call.1} parent=1 // pred_fallthru
      _
    // Predicated region
    $region6: #{tpu_custom_call.1} parent=1 // pred_check
      _
    $region7: #{tpu_custom_call.1} parent=1 // pred_check_branch
      %24 = sbr.rel (0) target = $region9
    $region8: #{tpu_custom_call.1} parent=1 // pred_region
      %s26 = ssub.s32 1024, 1024
      %27 = vsyncadd [#allocation6], %s26
      %s28 = sshll.u32 [#allocation5], 4
      %s29 = int_to_ptr.vmem [resolvable:$true] %s28
      %34 = dma.hbm_to_vmem [thread:$0]  %s1, 1024, %s29, [#allocation6], 64, 64, 4
    $region9: #{tpu_custom_call.1} parent=1 // pred_fallthru
      _
    // Predicated region
    $region10: #{tpu_custom_call.1} parent=1 // pred_check
      _
    $region11: #{tpu_custom_call.1} parent=1 // pred_check_branch
      %36 = sbr.rel (0) target = $region13
    $region12: #{tpu_custom_call.1} parent=1 // pred_region
      _
    $region13: #{tpu_custom_call.1} parent=1 // pred_fallthru
      _
    // Predicated region
    $region14: #{tpu_custom_call.1} parent=1 // pred_check
      _
    $region15: #{tpu_custom_call.1} parent=1 // pred_check_branch
      %38 = sbr.rel (0) target = $region17
    $region16: #{tpu_custom_call.1} parent=1 // pred_region
      %s40 = ssub.s32 1024, 1024
      %41 = vsyncadd [#allocation6], %s40
      %s42 = sshll.u32 [#allocation7], 4
      %s43 = int_to_ptr.vmem [resolvable:$true] %s42
      %48 = dma.hbm_to_vmem [thread:$0]  %s3, 1024, %s43, [#allocation6], 64, 64, 4
    $region17: #{tpu_custom_call.1} parent=1 // pred_fallthru
      _
    // Predicated region
    $region18: #{tpu_custom_call.1} parent=1 // pred_check
      _
    $region19: #{tpu_custom_call.1} parent=1 // pred_check_branch
      %50 = sbr.rel (0) target = $region21
    $region20: #{tpu_custom_call.1} parent=1 // pred_region
      _
    $region21: #{tpu_custom_call.1} parent=1 // pred_fallthru
      _
    // Predicated region
    $region22: #{tpu_custom_call.1} parent=1 // pred_check
      _
    $region23: #{tpu_custom_call.1} parent=1 // pred_check_branch
      %52 = sbr.rel (0) target = $region25
    $region24: #{tpu_custom_call.1} parent=1 // pred_region
      %53 = dma.done [#allocation3], 128
    $region25: #{tpu_custom_call.1} parent=1 // pred_fallthru
      _
    // Predicated region
    $region26: #{tpu_custom_call.1} parent=1 // pred_check
      _
    $region27: #{tpu_custom_call.1} parent=1 // pred_check_branch
      %55 = sbr.rel (0) target = $region29
    $region28: #{tpu_custom_call.1} parent=1 // pred_region
      %56 = dma.done [#allocation6], 1024
    $region29: #{tpu_custom_call.1} parent=1 // pred_fallthru
      _
    // Predicated region
    $region30: #{tpu_custom_call.1} parent=1 // pred_check
      _
    $region31: #{tpu_custom_call.1} parent=1 // pred_check_branch
      %58 = sbr.rel (0) target = $region33
    $region32: #{tpu_custom_call.1} parent=1 // pred_region
      %59 = dma.done [#allocation6], 1024
    $region33: #{tpu_custom_call.1} parent=1 // pred_fallthru
      _
    %v61 = vld [vmem:[#allocation2] sm:$0xff]
    %v62 = vld [vmem:[#allocation5] sm:$0xf]
    %v63 = vld [vmem:[#allocation5 + $0x4] sm:$0xf]
    %v64 = vld [vmem:[#allocation5 + $0x8] sm:$0xf]
    %v65 = vld [vmem:[#allocation5 + $0xc] sm:$0xf]
    %v66 = vld [vmem:[#allocation5 + $0x10] sm:$0xf]
    %v67 = vld [vmem:[#allocation5 + $0x14] sm:$0xf]
    %v68 = vld [vmem:[#allocation5 + $0x18] sm:$0xf]
    %v69 = vld [vmem:[#allocation5 + $0x1c] sm:$0xf]
    %v70 = vld [vmem:[#allocation5 + $0x20] sm:$0xf]
    %v71 = vld [vmem:[#allocation5 + $0x24] sm:$0xf]
    %v72 = vld [vmem:[#allocation5 + $0x28] sm:$0xf]
    %v73 = vld [vmem:[#allocation5 + $0x2c] sm:$0xf]
    %v74 = vld [vmem:[#allocation5 + $0x30] sm:$0xf]
    %v75 = vld [vmem:[#allocation5 + $0x34] sm:$0xf]
    %v76 = vld [vmem:[#allocation5 + $0x38] sm:$0xf]
    %v77 = vld [vmem:[#allocation5 + $0x3c] sm:$0xf]
    %v78 = vld [vmem:[%s2] sm:$0x1]
    %v79 = vpack.c.bf16 %v61, %v61
    %v81 = vlaneseq
    %v82 = vshrl.u32 %v81, 7
    %v83 = vsub.s32 0, %v82
    %v84 = vrot.slane %v78, %v83
    %v102 = vunpack.c.l.b16 %v62
    %v103 = vunpack.c.l.b16 %v63
    %v104 = vunpack.c.l.b16 %v64
    %v105 = vunpack.c.l.b16 %v65
    %v106 = vunpack.c.l.b16 %v66
    %v107 = vunpack.c.l.b16 %v67
    %v108 = vunpack.c.l.b16 %v68
    %v109 = vunpack.c.l.b16 %v69
    %v110 = vunpack.c.l.b16 %v70
    %v111 = vunpack.c.l.b16 %v71
    %v112 = vunpack.c.l.b16 %v72
    %v113 = vunpack.c.l.b16 %v73
    %v114 = vunpack.c.l.b16 %v74
    %v115 = vunpack.c.l.b16 %v75
    %v116 = vunpack.c.l.b16 %v76
    %v117 = vunpack.c.l.b16 %v77
    %v118 = vpack.c.b16 %v103, %v102
    %v119 = vpack.c.b16 %v105, %v104
    %v120 = vpack.c.b16 %v107, %v106
    %v121 = vpack.c.b16 %v109, %v108
    %v122 = vpack.c.b16 %v111, %v110
    %v123 = vpack.c.b16 %v113, %v112
    %v124 = vpack.c.b16 %v115, %v114
    %v125 = vpack.c.b16 %v117, %v116
    %134 = vmatprep.subr.bf16.mxu0 0
    %135 = vmatpush1.bf16.msra.mxu0 %v118
    %136 = vmatprep.subr.bf16.mxu0 0
    %137 = vmatpush1.bf16.msra.mxu0 %v119
    %138 = vmatprep.subr.bf16.mxu0 0
    %139 = vmatpush1.bf16.msra.mxu0 %v120
    %140 = vmatprep.subr.bf16.mxu0 0
    %141 = vmatpush1.bf16.msra.mxu0 %v121
    %142 = vmatprep.subr.bf16.mxu0 0
    %143 = vmatpush1.bf16.msra.mxu0 %v122
    %144 = vmatprep.subr.bf16.mxu0 0
    %145 = vmatpush1.bf16.msra.mxu0 %v123
    %146 = vmatprep.subr.bf16.mxu0 0
    %147 = vmatpush1.bf16.msra.mxu0 %v124
    %148 = vmatprep.subr.bf16.mxu0 0
    %149 = vmatpush1.bf16.msra.mxu0 %v125
    %150 = vmatprep.subr.bf16.mxu0 0
    %151 = vmatpush1.bf16.msra.mxu0 0
    %152 = vmatprep.subr.bf16.mxu0 0
    %153 = vmatpush1.bf16.msra.mxu0 0
    %154 = vmatprep.subr.bf16.mxu0 0
    %155 = vmatpush1.bf16.msra.mxu0 0
    %156 = vmatprep.subr.bf16.mxu0 0
    %157 = vmatpush1.bf16.msra.mxu0 0
    %158 = vmatprep.subr.bf16.mxu0 0
    %159 = vmatpush1.bf16.msra.mxu0 0
    %160 = vmatprep.subr.bf16.mxu0 0
    %161 = vmatpush1.bf16.msra.mxu0 0
    %162 = vmatprep.subr.bf16.mxu0 0
    %163 = vmatpush1.bf16.msra.mxu0 0
    %164 = vmatprep.subr.bf16.mxu0 0
    %165 = vmatpush1.bf16.msra.mxu0 0
    %166 = vmatprep.mubr.bf16.mxu0 0
    %167 = vmatmul.mubr.bf16.gmra.mrb[0].mxu0 %v79
    %v168 = vpop.f32.mrb[0].mxu0
    %v169 = vadd.f32 %v84, %v168
    %v170 = vpop.f32.mrb[0].mxu0
    %v171 = vpop.f32.mrb[0].mxu0
    %v172 = vpop.f32.mrb[0].mxu0
    %173 = vdwg.mxu0
    %v174 = vtanh.pop %v169
    %v175 = vld [vmem:[#allocation7] sm:$0xf]
    %v176 = vld [vmem:[#allocation7 + $0x4] sm:$0xf]
    %v177 = vld [vmem:[#allocation7 + $0x8] sm:$0xf]
    %v178 = vld [vmem:[#allocation7 + $0xc] sm:$0xf]
    %v179 = vld [vmem:[#allocation7 + $0x10] sm:$0xf]
    %v180 = vld [vmem:[#allocation7 + $0x14] sm:$0xf]
    %v181 = vld [vmem:[#allocation7 + $0x18] sm:$0xf]
    %v182 = vld [vmem:[#allocation7 + $0x1c] sm:$0xf]
    %v183 = vld [vmem:[#allocation7 + $0x20] sm:$0xf]
    %v184 = vld [vmem:[#allocation7 + $0x24] sm:$0xf]
    %v185 = vld [vmem:[#allocation7 + $0x28] sm:$0xf]
    %v186 = vld [vmem:[#allocation7 + $0x2c] sm:$0xf]
    %v187 = vld [vmem:[#allocation7 + $0x30] sm:$0xf]
    %v188 = vld [vmem:[#allocation7 + $0x34] sm:$0xf]
    %v189 = vld [vmem:[#allocation7 + $0x38] sm:$0xf]
    %v190 = vld [vmem:[#allocation7 + $0x3c] sm:$0xf]
    %v191 = vld [vmem:[%s4] sm:$0x1]
    %v192 = vpack.c.bf16 %v174, %v174
    %v194 = vlaneseq
    %v195 = vshrl.u32 %v194, 7
    %v196 = vsub.s32 0, %v195
    %v197 = vrot.slane %v191, %v196
    %v215 = vunpack.c.l.b16 %v175
    %v216 = vunpack.c.l.b16 %v176
    %v217 = vunpack.c.l.b16 %v177
    %v218 = vunpack.c.l.b16 %v178
    %v219 = vunpack.c.l.b16 %v179
    %v220 = vunpack.c.l.b16 %v180
    %v221 = vunpack.c.l.b16 %v181
    %v222 = vunpack.c.l.b16 %v182
    %v223 = vunpack.c.l.b16 %v183
    %v224 = vunpack.c.l.b16 %v184
    %v225 = vunpack.c.l.b16 %v185
    %v226 = vunpack.c.l.b16 %v186
    %v227 = vunpack.c.l.b16 %v187
    %v228 = vunpack.c.l.b16 %v188
    %v229 = vunpack.c.l.b16 %v189
    %v230 = vunpack.c.l.b16 %v190
    %v231 = vpack.c.b16 %v216, %v215
    %v232 = vpack.c.b16 %v218, %v217
    %v233 = vpack.c.b16 %v220, %v219
    %v234 = vpack.c.b16 %v222, %v221
    %v235 = vpack.c.b16 %v224, %v223
    %v236 = vpack.c.b16 %v226, %v225
    %v237 = vpack.c.b16 %v228, %v227
    %v238 = vpack.c.b16 %v230, %v229
    %247 = vmatprep.subr.bf16.mxu0 0
    %248 = vmatpush1.bf16.msra.mxu0 %v231
    %249 = vmatprep.subr.bf16.mxu0 0
    %250 = vmatpush1.bf16.msra.mxu0 %v232
    %251 = vmatprep.subr.bf16.mxu0 0
    %252 = vmatpush1.bf16.msra.mxu0 %v233
    %253 = vmatprep.subr.bf16.mxu0 0
    %254 = vmatpush1.bf16.msra.mxu0 %v234
    %255 = vmatprep.subr.bf16.mxu0 0
    %256 = vmatpush1.bf16.msra.mxu0 %v235
    %257 = vmatprep.subr.bf16.mxu0 0
    %258 = vmatpush1.bf16.msra.mxu0 %v236
    %259 = vmatprep.subr.bf16.mxu0 0
    %260 = vmatpush1.bf16.msra.mxu0 %v237
    %261 = vmatprep.subr.bf16.mxu0 0
    %262 = vmatpush1.bf16.msra.mxu0 %v238
    %263 = vmatprep.subr.bf16.mxu0 0
    %264 = vmatpush1.bf16.msra.mxu0 0
    %265 = vmatprep.subr.bf16.mxu0 0
    %266 = vmatpush1.bf16.msra.mxu0 0
    %267 = vmatprep.subr.bf16.mxu0 0
    %268 = vmatpush1.bf16.msra.mxu0 0
    %269 = vmatprep.subr.bf16.mxu0 0
    %270 = vmatpush1.bf16.msra.mxu0 0
    %271 = vmatprep.subr.bf16.mxu0 0
    %272 = vmatpush1.bf16.msra.mxu0 0
    %273 = vmatprep.subr.bf16.mxu0 0
    %274 = vmatpush1.bf16.msra.mxu0 0
    %275 = vmatprep.subr.bf16.mxu0 0
    %276 = vmatpush1.bf16.msra.mxu0 0
    %277 = vmatprep.subr.bf16.mxu0 0
    %278 = vmatpush1.bf16.msra.mxu0 0
    %279 = vmatprep.mubr.bf16.mxu0 0
    %280 = vmatmul.mubr.bf16.gmra.mrb[0].mxu0 %v192
    %v281 = vpop.f32.mrb[0].mxu0
    %v282 = vadd.f32 %v197, %v281
    %v283 = vpop.f32.mrb[0].mxu0
    %v284 = vpop.f32.mrb[0].mxu0
    %v285 = vpop.f32.mrb[0].mxu0
    %286 = vdwg.mxu0
    %287 = vst [vmem:[#allocation8] sm:$0xff] %v282
    // Predicated region
    $region34: #{tpu_custom_call.1} parent=1 // pred_check
      _
    $region35: #{tpu_custom_call.1} parent=1 // pred_check_branch
      %289 = sbr.rel (0) target = $region37
    $region36: #{tpu_custom_call.1} parent=1 // pred_region
      %s291 = ssub.s32 128, 128
      %292 = vsyncadd [#allocation4], %s291
      %s294 = sshll.u32 [#allocation8], 4
      %s295 = int_to_ptr.vmem [resolvable:$true] %s294
      %297 = dma.vmem_to_hbm [thread:$0]  %s295, 128, %s5, [#allocation4]
    $region37: #{tpu_custom_call.1} parent=1 // pred_fallthru
      _
    // Predicated region
    $region38: #{tpu_custom_call.1} parent=1 // pred_check
      _
    $region39: #{tpu_custom_call.1} parent=1 // pred_check_branch
      %299 = sbr.rel (0) target = $region41
    $region40: #{tpu_custom_call.1} parent=1 // pred_region
      %300 = dma.done [#allocation4], 128
    $region41: #{tpu_custom_call.1} parent=1 // pred_fallthru
      _
    %301 = vsyncpa [#allocation3], 1
    %302 = vsyncpa [#allocation6], 1
    %303 = vsyncpa [#allocation4], 1

</llo_original>
